<compile_context>
chip_gen: v7x
topology: tpu7x:2x2x1
jax: 0.10.0
libtpu: 0.0.40
codegen_flags: <defaults>
</compile_context>

<pallas_src>
import jax
import jax.numpy as jnp
from jax.experimental import pallas as pl
from jax.experimental.pallas import tpu as pltpu  # noqa: F401  (kept for users extending this kernel)


def stdcov_kernel(x_ref, at_ref, mt_ref, bias_ref, o_ref):
    # x_ref   : (B*C*T, N)      f32   x_input flattened — natural layout, no transpose
    # at_ref  : (N, N)          bf16  (W_lin + I)^T  (linear + residual, pre-combined)
    # mt_ref  : (P, B*C*T)      bf16  conv-as-matmul matrix (Toeplitz, block-diag in batch)
    # bias_ref: (P, N)          f32   folded bias: (b_lin routed through conv) + b_conv
    # o_ref   : (P, N)          f32   P = B*c_out*T_out, reshapes for free to (B,c_out,T_out,N)
    x_bf = x_ref[...].astype(jnp.bfloat16)

    # z = x_flat @ (W_lin + I)^T   — nn.Linear over n_node plus the residual (= x_input).
    z = jnp.dot(x_bf, at_ref[...], preferred_element_type=jnp.float32)

    # Conv2d with kernel (K, 1) over (channel, time window) as ONE MXU matmul
    # against the precomputed matrix M^T (contraction dim = B*C*T).
    acc = jnp.dot(mt_ref[...], z.astype(jnp.bfloat16),
                  preferred_element_type=jnp.float32)

    o_ref[...] = jax.nn.sigmoid(acc + bias_ref[...]).astype(o_ref.dtype)


def stdcov_prep(w_lin, b_lin, w_conv, b_conv, x_shape, kernel_size):
    """Weight-only preprocessing.  Call ONCE (module init), NOT per forward."""
    B, C, T, N = x_shape
    c_out = w_conv.shape[0]
    K = kernel_size
    T_out = T - K + 1

    # (W_lin + I)^T : z = x_flat @ A^T + b_lin[None, :]
    A_T = w_lin.astype(jnp.float32).T + jnp.eye(N, dtype=jnp.float32)

    # Conv-as-matmul (already transposed so the kernel output lands in the
    # module's natural (b, c_out, t, n) layout with no post-transpose):
    #   MT[(b,co,t), (b',c,s)] = w_conv[co, c, s-t, 0] * (b==b') * (0 <= s-t < K)
    w = w_conv[..., 0].astype(jnp.float32)                  # (c_out, C, K)
    MT4 = jnp.zeros((c_out, T_out, C, T), jnp.float32)      # [co, t, c, s]
    for k in range(K):                                      # K is tiny; static python loop
        shift = jnp.eye(T_out, T, k, dtype=jnp.float32)     # shift[t, s] = 1 iff s == t + k
        MT4 = MT4 + w[:, :, k][:, None, :, None] * shift[None, :, None, :]
    MT = jnp.einsum('ab,otcs->aotbcs', jnp.eye(B, dtype=jnp.float32), MT4)
    MT = MT.reshape(B * c_out * T_out, B * C * T)           # (P, B*C*T) = (224, 128) here

    # Fold both biases into a single f32 slab added in the dot epilogue:
    #   MT @ (b_lin broadcast over rows) = rowsum(MT)[:, None] * b_lin[None, :]
    rowsum = jnp.sum(MT, axis=1)                                            # (P,)
    bconv_rows = jnp.broadcast_to(
        b_conv.astype(jnp.float32)[None, :, None], (B, c_out, T_out)).reshape(-1)
    bias_pn = rowsum[:, None] * b_lin.astype(jnp.float32)[None, :] \
        + bconv_rows[:, None]                                               # (P, N)

    # bf16 MXU operands, f32 accumulation / bias / sigmoid epilogue.
    return A_T.astype(jnp.bfloat16), MT.astype(jnp.bfloat16), bias_pn


def make_stdcov_forward(x_shape, kernel_size, c_out, w_lin, b_lin, w_conv, b_conv):
    """Returns a jitted forward(x) with all weight prep hoisted out of the hot path."""
    B, C, T, N = x_shape
    K = kernel_size
    T_out = T - K + 1
    BCT = B * C * T
    P = B * c_out * T_out

    at_bf, mt_bf, bias_pn = stdcov_prep(w_lin, b_lin, w_conv, b_conv, x_shape, K)

    cost = pl.CostEstimate(
        flops=2 * BCT * N * N + 2 * P * BCT * N,
        transcendentals=P * N,
        bytes_accessed=(BCT * N * 4 + N * N * 2 + P * BCT * 2 + 2 * P * N * 4),
    )

    # Single invocation, no grid, no BlockSpec pipelining: whole arrays live in
    # VMEM (~0.1 MiB total), so there is nothing to double-buffer.
    call = pl.pallas_call(
        stdcov_kernel,
        out_shape=jax.ShapeDtypeStruct((P, N), jnp.float32),
        cost_estimate=cost,
    )

    @jax.jit
    def forward(x):
        # Both reshapes below are contiguous (metadata-only) — no XLA transpose
        # or copy kernels around the Pallas call.
        out = call(x.reshape(BCT, N), at_bf, mt_bf, bias_pn)
        return out.reshape(B, c_out, T_out, N)

    return forward


def stdcov_reference(x, w_lin, b_lin, w_conv, b_conv, kernel_size):
    """Pure-JAX f32 reference mirroring the PyTorch forward (UseConv=False)."""
    B, C, T, N = x.shape
    c_out = w_conv.shape[0]
    K = kernel_size
    T_out = T - K + 1
    lin = x.reshape(-1, N) @ w_lin.T + b_lin
    z = lin.reshape(B, C, T, N) + x
    out = jnp.zeros((B, c_out, T_out, N), jnp.float32)
    for k in range(K):
        out = out + jnp.einsum('oc,bctn->botn', w_conv[:, :, k, 0],
                               z[:, :, k:k + T_out, :])
    out = out + b_conv[None, :, None, None]
    return jax.nn.sigmoid(out)


if __name__ == "__main__":
    # Shapes consistent with the module: x_shape = [B, C_in, T_slot, N_node]
    B, C_in, T_slot, N_node = 2, 4, 16, 16
    Kernel_size, C_out = 3, 8

    key = jax.random.PRNGKey(0)
    kx, kw1, kb1, kw2, kb2 = jax.random.split(key, 5)

    x = jax.random.normal(kx, (B, C_in, T_slot, N_node), dtype=jnp.float32)
    # nn.Linear(n_node, n_node): weight (N, N), bias (N,)
    w_lin = jax.random.normal(kw1, (N_node, N_node), dtype=jnp.float32) * 0.1
    b_lin = jax.random.normal(kb1, (N_node,), dtype=jnp.float32) * 0.1
    # nn.Conv2d(C_in, C_out, (K, 1)): weight (C_out, C_in, K, 1), bias (C_out,)
    w_conv = jax.random.normal(kw2, (C_out, C_in, Kernel_size, 1), dtype=jnp.float32) * 0.1
    b_conv = jax.random.normal(kb2, (C_out,), dtype=jnp.float32) * 0.1

    # Weight prep happens ONCE here (module init), not inside the forward pass.
    forward = make_stdcov_forward((B, C_in, T_slot, N_node), Kernel_size, C_out,
                                  w_lin, b_lin, w_conv, b_conv)

    out = jax.block_until_ready(forward(x))

    ref = stdcov_reference(x, w_lin, b_lin, w_conv, b_conv, Kernel_size)
    assert out.shape == (B, C_out, T_slot - Kernel_size + 1, N_node)
    max_err = float(jnp.max(jnp.abs(out - ref)))
    # bf16 MXU operands vs f32 reference: post-sigmoid error is ~1e-3..1e-2.
    assert jnp.allclose(out, ref, atol=3e-2, rtol=3e-2), max_err

    print("KERNEL_OK")
</pallas_src>

<mosaic_0001>
module attributes {stable_mosaic.version = 11 : i64} {
  func.func @stdcov_kernel(%arg0: memref<128x16xf32, #tpu.memory_space<vmem>>, %arg1: memref<16x16xbf16, #tpu.memory_space<vmem>>, %arg2: memref<224x128xbf16, #tpu.memory_space<vmem>>, %arg3: memref<224x16xf32, #tpu.memory_space<vmem>>, %arg4: memref<224x16xf32, #tpu.memory_space<vmem>>) attributes {dimension_semantics = [], scalar_prefetch = 0 : i64, scratch_operands = 0 : i64, tpu.core_type = #tpu.core_type<tc>} {
    %c0 = arith.constant 0 : index
    %c0_0 = arith.constant 0 : index
    %0 = vector.load %arg0[%c0, %c0_0] : memref<128x16xf32, #tpu.memory_space<vmem>>, vector<128x16xf32>
    %1 = arith.truncf %0 : vector<128x16xf32> to vector<128x16xbf16>
    %c0_1 = arith.constant 0 : index
    %c0_2 = arith.constant 0 : index
    %2 = vector.load %arg1[%c0_1, %c0_2] : memref<16x16xbf16, #tpu.memory_space<vmem>>, vector<16x16xbf16>
    %cst = arith.constant dense<0.000000e+00> : vector<128x16xf32>
    %3 = tpu.matmul %1, %2, %cst {dimension_numbers = #tpu.dot_dimension_numbers<[1], [0], [0], [1], [0, 0, 1, 1], [], []>} : vector<128x16xbf16>, vector<16x16xbf16>, vector<128x16xf32> -> vector<128x16xf32>
    %c0_3 = arith.constant 0 : index
    %c0_4 = arith.constant 0 : index
    %4 = vector.load %arg2[%c0_3, %c0_4] : memref<224x128xbf16, #tpu.memory_space<vmem>>, vector<224x128xbf16>
    %5 = arith.truncf %3 : vector<128x16xf32> to vector<128x16xbf16>
    %cst_5 = arith.constant dense<0.000000e+00> : vector<224x16xf32>
    %6 = tpu.matmul %4, %5, %cst_5 {dimension_numbers = #tpu.dot_dimension_numbers<[1], [0], [0], [1], [0, 0, 1, 1], [], []>} : vector<224x128xbf16>, vector<128x16xbf16>, vector<224x16xf32> -> vector<224x16xf32>
    %c0_6 = arith.constant 0 : index
    %c0_7 = arith.constant 0 : index
    %7 = vector.load %arg3[%c0_6, %c0_7] : memref<224x16xf32, #tpu.memory_space<vmem>>, vector<224x16xf32>
    %8 = arith.addf %6, %7 : vector<224x16xf32>
    %9 = arith.negf %8 : vector<224x16xf32>
    %10 = math.exp %9 : vector<224x16xf32>
    %cst_8 = arith.constant 1.000000e+00 : f32
    %11 = vector.broadcast %cst_8 : f32 to vector<224x16xf32>
    %12 = arith.addf %11, %10 : vector<224x16xf32>
    %13 = arith.divf %11, %12 : vector<224x16xf32>
    %c0_9 = arith.constant 0 : index
    %c0_10 = arith.constant 0 : index
    %14 = vector.load %arg4[%c0_9, %c0_10] : memref<224x16xf32, #tpu.memory_space<vmem>>, vector<224x16xf32>
    tpu.vector_store %arg4[%c0_9, %c0_10], %13 {strides = array<i32>} : memref<224x16xf32, #tpu.memory_space<vmem>>, vector<224x16xf32>,
    return
  }
}

</mosaic_0001>

<llo_original>
// kernel: forward.1
$region0: #{forward.1}
  #allocation0 [shape = 'u32[]', space=smem, size = 0x4, offset = 0x4, fixed_abs, tag = 'smem constant byte address 0x4 - core index']
  #allocation1 [shape = 'u32[144,128]{1,0:T(1,128)}', space=vmem, size = 0x12000, scoped, tag = 'internal scratch']
  %s0 = inlined_call_operand.hbm [shape: f32[128,16], index: 0, kind: input, shape index: {}]
  %s1 = inlined_call_operand.vmem [shape: bf16[16,16], index: 1, kind: input, shape index: {}]
  %s2 = inlined_call_operand.hbm [shape: bf16[224,128], index: 2, kind: input, shape index: {}]
  %s3 = inlined_call_operand.hbm [shape: f32[224,16], index: 3, kind: input, shape index: {}]
  %s4 = inlined_call_operand.vmem [shape: f32[224,16], index: 4, kind: output, shape index: {}]
  %s5 = sld [smem:[#allocation0]]
  $region38: #{forward.1} parent=0
    _
  %s7 = ssub.s32 1, %s5
  %s8 = scalar_select 0, %s7, %s5
  $region1: #{forward.1} parent=0
    #allocation2 [shape = 'u8[65536]{0}', space=vmem, size = 0x10000, scoped, tag = 'input window, operand 0, single buffered']
    #allocation3 [shape = 's32[1]{0}', space=sflag, size = 0x4, scoped, tag = 'scoped memory for forward.1']
    #allocation4 [shape = 'u8[57344]{0}', space=vmem, size = 0xe000, scoped, tag = 'input window, operand 2, single buffered']
    #allocation5 [shape = 's32[1]{0}', space=sflag, size = 0x4, scoped, tag = 'scoped memory for forward.1']
    #allocation6 [shape = 'u8[114688]{0}', space=vmem, size = 0x1c000, scoped, tag = 'input window, operand 3, single buffered']
    %9 = vsyncpa [#allocation3], 0
    %10 = vsyncpa [#allocation5], 0
    // Predicated region
    $region2: #{forward.1} parent=1 // pred_check
      _
    $region3: #{forward.1} parent=1 // pred_check_branch
      %12 = sbr.rel (0) target = $region5
    $region4: #{forward.1} parent=1 // pred_region
      %s14 = ssub.s32 2048, 2048
      %15 = vsyncadd [#allocation3], %s14
      %s16 = sshll.u32 [#allocation2], 4
      %s17 = int_to_ptr.vmem [resolvable:$true] %s16
      %22 = dma.hbm_to_vmem [thread:$0]  %s0, 2048, %s17, [#allocation3], 128, 128, 8
    $region5: #{forward.1} parent=1 // pred_fallthru
      _
    // Predicated region
    $region6: #{forward.1} parent=1 // pred_check
      _
    $region7: #{forward.1} parent=1 // pred_check_branch
      %24 = sbr.rel (0) target = $region9
    $region8: #{forward.1} parent=1 // pred_region
      _
    $region9: #{forward.1} parent=1 // pred_fallthru
      _
    // Predicated region
    $region10: #{forward.1} parent=1 // pred_check
      _
    $region11: #{forward.1} parent=1 // pred_check_branch
      %26 = sbr.rel (0) target = $region13
    $region12: #{forward.1} parent=1 // pred_region
      %s28 = ssub.s32 1792, 1792
      %29 = vsyncadd [#allocation5], %s28
      %s30 = sshll.u32 [#allocation4], 4
      %s31 = int_to_ptr.vmem [resolvable:$true] %s30
      %36 = dma.hbm_to_vmem [thread:$0]  %s2, 1792, %s31, [#allocation5], 64, 64, 4
    $region13: #{forward.1} parent=1 // pred_fallthru
      _
    // Predicated region
    $region14: #{forward.1} parent=1 // pred_check
      _
    $region15: #{forward.1} parent=1 // pred_check_branch
      %38 = sbr.rel (0) target = $region17
    $region16: #{forward.1} parent=1 // pred_region
      %s40 = ssub.s32 3584, 3584
      %41 = vsyncadd [#allocation5], %s40
      %s42 = sshll.u32 [#allocation6], 4
      %s43 = int_to_ptr.vmem [resolvable:$true] %s42
      %48 = dma.hbm_to_vmem [thread:$0]  %s3, 3584, %s43, [#allocation5], 128, 128, 8
    $region17: #{forward.1} parent=1 // pred_fallthru
      _
    // Predicated region
    $region18: #{forward.1} parent=1 // pred_check
      _
    $region19: #{forward.1} parent=1 // pred_check_branch
      %50 = sbr.rel (0) target = $region21
    $region20: #{forward.1} parent=1 // pred_region
      %51 = dma.done [#allocation3], 2048
    $region21: #{forward.1} parent=1 // pred_fallthru
      _
    // Predicated region
    $region22: #{forward.1} parent=1 // pred_check
      _
    $region23: #{forward.1} parent=1 // pred_check_branch
      %53 = sbr.rel (0) target = $region25
    $region24: #{forward.1} parent=1 // pred_region
      %54 = dma.done [#allocation5], 1792
    $region25: #{forward.1} parent=1 // pred_fallthru
      _
    // Predicated region
    $region26: #{forward.1} parent=1 // pred_check
      _
    $region27: #{forward.1} parent=1 // pred_check_branch
      %56 = sbr.rel (0) target = $region29
    $region28: #{forward.1} parent=1 // pred_region
      %57 = dma.done [#allocation5], 3584
    $region29: #{forward.1} parent=1 // pred_fallthru
      _
    %v59 = vld [vmem:[#allocation2] sm:$0xff]
    %v60 = vld [vmem:[#allocation2 + $0x8] sm:$0xff]
    %v61 = vld [vmem:[#allocation2 + $0x10] sm:$0xff]
    %v62 = vld [vmem:[#allocation2 + $0x18] sm:$0xff]
    %v63 = vld [vmem:[#allocation2 + $0x20] sm:$0xff]
    %v64 = vld [vmem:[#allocation2 + $0x28] sm:$0xff]
    %v65 = vld [vmem:[#allocation2 + $0x30] sm:$0xff]
    %v66 = vld [vmem:[#allocation2 + $0x38] sm:$0xff]
    %v67 = vld [vmem:[#allocation2 + $0x40] sm:$0xff]
    %v68 = vld [vmem:[#allocation2 + $0x48] sm:$0xff]
    %v69 = vld [vmem:[#allocation2 + $0x50] sm:$0xff]
    %v70 = vld [vmem:[#allocation2 + $0x58] sm:$0xff]
    %v71 = vld [vmem:[#allocation2 + $0x60] sm:$0xff]
    %v72 = vld [vmem:[#allocation2 + $0x68] sm:$0xff]
    %v73 = vld [vmem:[#allocation2 + $0x70] sm:$0xff]
    %v74 = vld [vmem:[#allocation2 + $0x78] sm:$0xff]
    %v75 = vpack.c.bf16 %v60, %v59
    %v76 = vpack.c.bf16 %v62, %v61
    %v77 = vpack.c.bf16 %v64, %v63
    %v78 = vpack.c.bf16 %v66, %v65
    %v79 = vpack.c.bf16 %v68, %v67
    %v80 = vpack.c.bf16 %v70, %v69
    %v81 = vpack.c.bf16 %v72, %v71
    %v82 = vpack.c.bf16 %v74, %v73
    %v83 = vld [vmem:[%s1] sm:$0xf]
    %v84 = vld [vmem:[%s1 + $0x4] sm:$0xf]
    %v87 = vunpack.c.l.b16 %v83
    %v88 = vunpack.c.l.b16 %v84
    %v89 = vpack.c.b16 %v88, %v87
    %vm91 = vcmask 130048
    %v93 = vsel %vm91, %v75, 0
    %v96 = vsel %vm91, %v76, 0
    %v99 = vsel %vm91, %v77, 0
    %v102 = vsel %vm91, %v78, 0
    %v105 = vsel %vm91, %v79, 0
    %v108 = vsel %vm91, %v80, 0
    %v111 = vsel %vm91, %v81, 0
    %v114 = vsel %vm91, %v82, 0
    %116 = vmatprep.subr.bf16.mxu0 0
    %117 = vmatpush1.bf16.msra.mxu0 %v89
    %118 = vmatprep.subr.bf16.mxu0 0
    %119 = vmatpush1.bf16.msra.mxu0 0
    %120 = vmatprep.subr.bf16.mxu0 0
    %121 = vmatpush1.bf16.msra.mxu0 0
    %122 = vmatprep.subr.bf16.mxu0 0
    %123 = vmatpush1.bf16.msra.mxu0 0
    %124 = vmatprep.subr.bf16.mxu0 0
    %125 = vmatpush1.bf16.msra.mxu0 0
    %126 = vmatprep.subr.bf16.mxu0 0
    %127 = vmatpush1.bf16.msra.mxu0 0
    %128 = vmatprep.subr.bf16.mxu0 0
    %129 = vmatpush1.bf16.msra.mxu0 0
    %130 = vmatprep.subr.bf16.mxu0 0
    %131 = vmatpush1.bf16.msra.mxu0 0
    %132 = vmatprep.subr.bf16.mxu0 0
    %133 = vmatpush1.bf16.msra.mxu0 0
    %134 = vmatprep.subr.bf16.mxu0 0
    %135 = vmatpush1.bf16.msra.mxu0 0
    %136 = vmatprep.subr.bf16.mxu0 0
    %137 = vmatpush1.bf16.msra.mxu0 0
    %138 = vmatprep.subr.bf16.mxu0 0
    %139 = vmatpush1.bf16.msra.mxu0 0
    %140 = vmatprep.subr.bf16.mxu0 0
    %141 = vmatpush1.bf16.msra.mxu0 0
    %142 = vmatprep.subr.bf16.mxu0 0
    %143 = vmatpush1.bf16.msra.mxu0 0
    %144 = vmatprep.subr.bf16.mxu0 0
    %145 = vmatpush1.bf16.msra.mxu0 0
    %146 = vmatprep.subr.bf16.mxu0 0
    %147 = vmatpush1.bf16.msra.mxu0 0
    %148 = vmatprep.mubr.bf16.mxu0 0
    %149 = vmatmul.mubr.bf16.gmra.mrb[0].mxu0 %v93
    %v150 = vpop.f32.mrb[0].mxu0
    %v151 = vadd.f32 0.0, %v150
    %v152 = vpop.f32.mrb[0].mxu0
    %v153 = vpop.f32.mrb[0].mxu0
    %v154 = vadd.f32 0.0, %v153
    %v155 = vpop.f32.mrb[0].mxu0
    %156 = vmatprep.mubr.bf16.mxu0 0
    %157 = vmatmul.mubr.bf16.gmra.mrb[0].mxu0 %v96
    %v158 = vpop.f32.mrb[0].mxu0
    %v159 = vadd.f32 0.0, %v158
    %v160 = vpop.f32.mrb[0].mxu0
    %v161 = vpop.f32.mrb[0].mxu0
    %v162 = vadd.f32 0.0, %v161
    %v163 = vpop.f32.mrb[0].mxu0
    %164 = vmatprep.mubr.bf16.mxu0 0
    %165 = vmatmul.mubr.bf16.gmra.mrb[0].mxu0 %v99
    %v166 = vpop.f32.mrb[0].mxu0
    %v167 = vadd.f32 0.0, %v166
    %v168 = vpop.f32.mrb[0].mxu0
    %v169 = vpop.f32.mrb[0].mxu0
    %v170 = vadd.f32 0.0, %v169
    %v171 = vpop.f32.mrb[0].mxu0
    %172 = vmatprep.mubr.bf16.mxu0 0
    %173 = vmatmul.mubr.bf16.gmra.mrb[0].mxu0 %v102
    %v174 = vpop.f32.mrb[0].mxu0
    %v175 = vadd.f32 0.0, %v174
    %v176 = vpop.f32.mrb[0].mxu0
    %v177 = vpop.f32.mrb[0].mxu0
    %v178 = vadd.f32 0.0, %v177
    %v179 = vpop.f32.mrb[0].mxu0
    %180 = vmatprep.mubr.bf16.mxu0 0
    %181 = vmatmul.mubr.bf16.gmra.mrb[0].mxu0 %v105
    %v182 = vpop.f32.mrb[0].mxu0
    %v183 = vadd.f32 0.0, %v182
    %v184 = vpop.f32.mrb[0].mxu0
    %v185 = vpop.f32.mrb[0].mxu0
    %v186 = vadd.f32 0.0, %v185
    %v187 = vpop.f32.mrb[0].mxu0
    %188 = vmatprep.mubr.bf16.mxu0 0
    %189 = vmatmul.mubr.bf16.gmra.mrb[0].mxu0 %v108
    %v190 = vpop.f32.mrb[0].mxu0
    %v191 = vadd.f32 0.0, %v190
    %v192 = vpop.f32.mrb[0].mxu0
    %v193 = vpop.f32.mrb[0].mxu0
    %v194 = vadd.f32 0.0, %v193
    %v195 = vpop.f32.mrb[0].mxu0
    %196 = vmatprep.mubr.bf16.mxu0 0
    %197 = vmatmul.mubr.bf16.gmra.mrb[0].mxu0 %v111
    %v198 = vpop.f32.mrb[0].mxu0
    %v199 = vadd.f32 0.0, %v198
    %v200 = vpop.f32.mrb[0].mxu0
    %v201 = vpop.f32.mrb[0].mxu0
    %v202 = vadd.f32 0.0, %v201
    %v203 = vpop.f32.mrb[0].mxu0
    %204 = vmatprep.mubr.bf16.mxu0 0
    %205 = vmatmul.mubr.bf16.gmra.mrb[0].mxu0 %v114
    %v206 = vpop.f32.mrb[0].mxu0
    %v207 = vadd.f32 0.0, %v206
    %v208 = vpop.f32.mrb[0].mxu0
    %v209 = vpop.f32.mrb[0].mxu0
    %v210 = vadd.f32 0.0, %v209
    %v211 = vpop.f32.mrb[0].mxu0
    %212 = vdwg.mxu0
    %v213 = vld [vmem:[#allocation4] sm:$0xf]
    %v214 = vld [vmem:[#allocation4 + $0x4] sm:$0xf]
    %v215 = vld [vmem:[#allocation4 + $0x8] sm:$0xf]
    %v216 = vld [vmem:[#allocation4 + $0xc] sm:$0xf]
    %v217 = vld [vmem:[#allocation4 + $0x10] sm:$0xf]
    %v218 = vld [vmem:[#allocation4 + $0x14] sm:$0xf]
    %v219 = vld [vmem:[#allocation4 + $0x18] sm:$0xf]
    %v220 = vld [vmem:[#allocation4 + $0x1c] sm:$0xf]
    %v221 = vld [vmem:[#allocation4 + $0x20] sm:$0xf]
    %v222 = vld [vmem:[#allocation4 + $0x24] sm:$0xf]
    %v223 = vld [vmem:[#allocation4 + $0x28] sm:$0xf]
    %v224 = vld [vmem:[#allocation4 + $0x2c] sm:$0xf]
    %v225 = vld [vmem:[#allocation4 + $0x30] sm:$0xf]
    %v226 = vld [vmem:[#allocation4 + $0x34] sm:$0xf]
    %v227 = vld [vmem:[#allocation4 + $0x38] sm:$0xf]
    %v228 = vld [vmem:[#allocation4 + $0x3c] sm:$0xf]
    %v229 = vld [vmem:[#allocation4 + $0x40] sm:$0xf]
    %v230 = vld [vmem:[#allocation4 + $0x44] sm:$0xf]
    %v231 = vld [vmem:[#allocation4 + $0x48] sm:$0xf]
    %v232 = vld [vmem:[#allocation4 + $0x4c] sm:$0xf]
    %v233 = vld [vmem:[#allocation4 + $0x50] sm:$0xf]
    %v234 = vld [vmem:[#allocation4 + $0x54] sm:$0xf]
    %v235 = vld [vmem:[#allocation4 + $0x58] sm:$0xf]
    %v236 = vld [vmem:[#allocation4 + $0x5c] sm:$0xf]
    %v237 = vld [vmem:[#allocation4 + $0x60] sm:$0xf]
    %v238 = vld [vmem:[#allocation4 + $0x64] sm:$0xf]
    %v239 = vld [vmem:[#allocation4 + $0x68] sm:$0xf]
    %v240 = vld [vmem:[#allocation4 + $0x6c] sm:$0xf]
    %v241 = vpack.c.bf16 %v154, %v151
    %v242 = vpack.c.bf16 %v162, %v159
    %v243 = vpack.c.bf16 %v170, %v167
    %v244 = vpack.c.bf16 %v178, %v175
    %v245 = vpack.c.bf16 %v186, %v183
    %v246 = vpack.c.bf16 %v194, %v191
    %v247 = vpack.c.bf16 %v202, %v199
    %v248 = vpack.c.bf16 %v210, %v207
    %v249 = vld [vmem:[#allocation6] sm:$0xff]
    %v250 = vld [vmem:[#allocation6 + $0x8] sm:$0xff]
    %v251 = vld [vmem:[#allocation6 + $0x10] sm:$0xff]
    %v252 = vld [vmem:[#allocation6 + $0x18] sm:$0xff]
    %v253 = vld [vmem:[#allocation6 + $0x20] sm:$0xff]
    %v254 = vld [vmem:[#allocation6 + $0x28] sm:$0xff]
    %v255 = vld [vmem:[#allocation6 + $0x30] sm:$0xff]
    %v256 = vld [vmem:[#allocation6 + $0x38] sm:$0xff]
    %v257 = vld [vmem:[#allocation6 + $0x40] sm:$0xff]
    %v258 = vld [vmem:[#allocation6 + $0x48] sm:$0xff]
    %v259 = vld [vmem:[#allocation6 + $0x50] sm:$0xff]
    %v260 = vld [vmem:[#allocation6 + $0x58] sm:$0xff]
    %v261 = vld [vmem:[#allocation6 + $0x60] sm:$0xff]
    %v262 = vld [vmem:[#allocation6 + $0x68] sm:$0xff]
    %v263 = vld [vmem:[#allocation6 + $0x70] sm:$0xff]
    %v264 = vld [vmem:[#allocation6 + $0x78] sm:$0xff]
    %v265 = vld [vmem:[#allocation6 + $0x80] sm:$0xff]
    %v266 = vld [vmem:[#allocation6 + $0x88] sm:$0xff]
    %v267 = vld [vmem:[#allocation6 + $0x90] sm:$0xff]
    %v268 = vld [vmem:[#allocation6 + $0x98] sm:$0xff]
    %v269 = vld [vmem:[#allocation6 + $0xa0] sm:$0xff]
    %v270 = vld [vmem:[#allocation6 + $0xa8] sm:$0xff]
    %v271 = vld [vmem:[#allocation6 + $0xb0] sm:$0xff]
    %v272 = vld [vmem:[#allocation6 + $0xb8] sm:$0xff]
    %v273 = vld [vmem:[#allocation6 + $0xc0] sm:$0xff]
    %v274 = vld [vmem:[#allocation6 + $0xc8] sm:$0xff]
    %v275 = vld [vmem:[#allocation6 + $0xd0] sm:$0xff]
    %v276 = vld [vmem:[#allocation6 + $0xd8] sm:$0xff]
    %v305 = vunpack.c.l.b16 %v213
    %v306 = vunpack.c.l.b16 %v214
    %v307 = vunpack.c.l.b16 %v215
    %v308 = vunpack.c.l.b16 %v216
    %v309 = vunpack.c.l.b16 %v217
    %v310 = vunpack.c.l.b16 %v218
    %v311 = vunpack.c.l.b16 %v219
    %v312 = vunpack.c.l.b16 %v220
    %v313 = vunpack.c.l.b16 %v221
    %v314 = vunpack.c.l.b16 %v222
    %v315 = vunpack.c.l.b16 %v223
    %v316 = vunpack.c.l.b16 %v224
    %v317 = vunpack.c.l.b16 %v225
    %v318 = vunpack.c.l.b16 %v226
    %v319 = vunpack.c.l.b16 %v227
    %v320 = vunpack.c.l.b16 %v228
    %v321 = vunpack.c.l.b16 %v229
    %v322 = vunpack.c.l.b16 %v230
    %v323 = vunpack.c.l.b16 %v231
    %v324 = vunpack.c.l.b16 %v232
    %v325 = vunpack.c.l.b16 %v233
    %v326 = vunpack.c.l.b16 %v234
    %v327 = vunpack.c.l.b16 %v235
    %v328 = vunpack.c.l.b16 %v236
    %v329 = vunpack.c.l.b16 %v237
    %v330 = vunpack.c.l.b16 %v238
    %v331 = vunpack.c.l.b16 %v239
    %v332 = vunpack.c.l.b16 %v240
    %v333 = vpack.c.b16 %v306, %v305
    %v334 = vpack.c.b16 %v308, %v307
    %v335 = vpack.c.b16 %v310, %v309
    %v336 = vpack.c.b16 %v312, %v311
    %v337 = vpack.c.b16 %v314, %v313
    %v338 = vpack.c.b16 %v316, %v315
    %v339 = vpack.c.b16 %v318, %v317
    %v340 = vpack.c.b16 %v320, %v319
    %v341 = vpack.c.b16 %v322, %v321
    %v342 = vpack.c.b16 %v324, %v323
    %v343 = vpack.c.b16 %v326, %v325
    %v344 = vpack.c.b16 %v328, %v327
    %v345 = vpack.c.b16 %v330, %v329
    %v346 = vpack.c.b16 %v332, %v331
    %361 = vmatprep.subr.bf16.mxu0 0
    %362 = vmatpush1.bf16.msra.mxu0 %v241
    %363 = vmatprep.subr.bf16.mxu0 0
    %364 = vmatpush1.bf16.msra.mxu0 %v242
    %365 = vmatprep.subr.bf16.mxu0 0
    %366 = vmatpush1.bf16.msra.mxu0 %v243
    %367 = vmatprep.subr.bf16.mxu0 0
    %368 = vmatpush1.bf16.msra.mxu0 %v244
    %369 = vmatprep.subr.bf16.mxu0 0
    %370 = vmatpush1.bf16.msra.mxu0 %v245
    %371 = vmatprep.subr.bf16.mxu0 0
    %372 = vmatpush1.bf16.msra.mxu0 %v246
    %373 = vmatprep.subr.bf16.mxu0 0
    %374 = vmatpush1.bf16.msra.mxu0 %v247
    %375 = vmatprep.subr.bf16.mxu0 0
    %376 = vmatpush1.bf16.msra.mxu0 %v248
    %377 = vmatprep.subr.bf16.mxu0 0
    %378 = vmatpush1.bf16.msra.mxu0 0
    %379 = vmatprep.subr.bf16.mxu0 0
    %380 = vmatpush1.bf16.msra.mxu0 0
    %381 = vmatprep.subr.bf16.mxu0 0
    %382 = vmatpush1.bf16.msra.mxu0 0
    %383 = vmatprep.subr.bf16.mxu0 0
    %384 = vmatpush1.bf16.msra.mxu0 0
    %385 = vmatprep.subr.bf16.mxu0 0
    %386 = vmatpush1.bf16.msra.mxu0 0
    %387 = vmatprep.subr.bf16.mxu0 0
    %388 = vmatpush1.bf16.msra.mxu0 0
    %389 = vmatprep.subr.bf16.mxu0 0
    %390 = vmatpush1.bf16.msra.mxu0 0
    %391 = vmatprep.subr.bf16.mxu0 0
    %392 = vmatpush1.bf16.msra.mxu0 0
    %393 = vmatprep.mubr.bf16.mxu0 0
    %394 = vmatmul.mubr.bf16.gmra.mrb[0].mxu0 %v333
    %v395 = vpop.f32.mrb[0].mxu0
    %v396 = vadd.f32 %v249, %v395
    %v397 = vpop.f32.mrb[0].mxu0
    %v398 = vpop.f32.mrb[0].mxu0
    %v399 = vadd.f32 %v250, %v398
    %v400 = vpop.f32.mrb[0].mxu0
    %401 = vmatprep.mubr.bf16.mxu0 0
    %402 = vmatmul.mubr.bf16.gmra.mrb[0].mxu0 %v334
    %v403 = vpop.f32.mrb[0].mxu0
    %v404 = vadd.f32 %v251, %v403
    %v405 = vpop.f32.mrb[0].mxu0
    %v406 = vpop.f32.mrb[0].mxu0
    %v407 = vadd.f32 %v252, %v406
    %v408 = vpop.f32.mrb[0].mxu0
    %409 = vmatprep.mubr.bf16.mxu0 0
    %410 = vmatmul.mubr.bf16.gmra.mrb[0].mxu0 %v335
    %v411 = vpop.f32.mrb[0].mxu0
    %v412 = vadd.f32 %v253, %v411
    %v413 = vpop.f32.mrb[0].mxu0
    %v414 = vpop.f32.mrb[0].mxu0
    %v415 = vadd.f32 %v254, %v414
    %v416 = vpop.f32.mrb[0].mxu0
    %417 = vmatprep.mubr.bf16.mxu0 0
    %418 = vmatmul.mubr.bf16.gmra.mrb[0].mxu0 %v336
    %v419 = vpop.f32.mrb[0].mxu0
    %v420 = vadd.f32 %v255, %v419
    %v421 = vpop.f32.mrb[0].mxu0
    %v422 = vpop.f32.mrb[0].mxu0
    %v423 = vadd.f32 %v256, %v422
    %v424 = vpop.f32.mrb[0].mxu0
    %425 = vmatprep.mubr.bf16.mxu0 0
    %426 = vmatmul.mubr.bf16.gmra.mrb[0].mxu0 %v337
    %v427 = vpop.f32.mrb[0].mxu0
    %v428 = vadd.f32 %v257, %v427
    %v429 = vpop.f32.mrb[0].mxu0
    %v430 = vpop.f32.mrb[0].mxu0
    %v431 = vadd.f32 %v258, %v430
    %v432 = vpop.f32.mrb[0].mxu0
    %433 = vmatprep.mubr.bf16.mxu0 0
    %434 = vmatmul.mubr.bf16.gmra.mrb[0].mxu0 %v338
    %v435 = vpop.f32.mrb[0].mxu0
    %v436 = vadd.f32 %v259, %v435
    %v437 = vpop.f32.mrb[0].mxu0
    %v438 = vpop.f32.mrb[0].mxu0
    %v439 = vadd.f32 %v260, %v438
    %v440 = vpop.f32.mrb[0].mxu0
    %441 = vmatprep.mubr.bf16.mxu0 0
    %442 = vmatmul.mubr.bf16.gmra.mrb[0].mxu0 %v339
    %v443 = vpop.f32.mrb[0].mxu0
    %v444 = vadd.f32 %v261, %v443
    %v445 = vpop.f32.mrb[0].mxu0
    %v446 = vpop.f32.mrb[0].mxu0
    %v447 = vadd.f32 %v262, %v446
    %v448 = vpop.f32.mrb[0].mxu0
    %449 = vmatprep.mubr.bf16.mxu0 0
    %450 = vmatmul.mubr.bf16.gmra.mrb[0].mxu0 %v340
    %v451 = vpop.f32.mrb[0].mxu0
    %v452 = vadd.f32 %v263, %v451
    %v453 = vpop.f32.mrb[0].mxu0
    %v454 = vpop.f32.mrb[0].mxu0
    %v455 = vadd.f32 %v264, %v454
    %v456 = vpop.f32.mrb[0].mxu0
    %457 = vmatprep.mubr.bf16.mxu0 0
    %458 = vmatmul.mubr.bf16.gmra.mrb[0].mxu0 %v341
    %v459 = vpop.f32.mrb[0].mxu0
    %v460 = vadd.f32 %v265, %v459
    %v461 = vpop.f32.mrb[0].mxu0
    %v462 = vpop.f32.mrb[0].mxu0
    %v463 = vadd.f32 %v266, %v462
    %v464 = vpop.f32.mrb[0].mxu0
    %465 = vmatprep.mubr.bf16.mxu0 0
    %466 = vmatmul.mubr.bf16.gmra.mrb[0].mxu0 %v342
    %v467 = vpop.f32.mrb[0].mxu0
    %v468 = vadd.f32 %v267, %v467
    %v469 = vpop.f32.mrb[0].mxu0
    %v470 = vpop.f32.mrb[0].mxu0
    %v471 = vadd.f32 %v268, %v470
    %v472 = vpop.f32.mrb[0].mxu0
    %473 = vmatprep.mubr.bf16.mxu0 0
    %474 = vmatmul.mubr.bf16.gmra.mrb[0].mxu0 %v343
    %v475 = vpop.f32.mrb[0].mxu0
    %v476 = vadd.f32 %v269, %v475
    %v477 = vpop.f32.mrb[0].mxu0
    %v478 = vpop.f32.mrb[0].mxu0
    %v479 = vadd.f32 %v270, %v478
    %v480 = vpop.f32.mrb[0].mxu0
    %481 = vmatprep.mubr.bf16.mxu0 0
    %482 = vmatmul.mubr.bf16.gmra.mrb[0].mxu0 %v344
    %v483 = vpop.f32.mrb[0].mxu0
    %v484 = vadd.f32 %v271, %v483
    %v485 = vpop.f32.mrb[0].mxu0
    %v486 = vpop.f32.mrb[0].mxu0
    %v487 = vadd.f32 %v272, %v486
    %v488 = vpop.f32.mrb[0].mxu0
    %489 = vmatprep.mubr.bf16.mxu0 0
    %490 = vmatmul.mubr.bf16.gmra.mrb[0].mxu0 %v345
    %v491 = vpop.f32.mrb[0].mxu0
    %v492 = vadd.f32 %v273, %v491
    %v493 = vpop.f32.mrb[0].mxu0
    %v494 = vpop.f32.mrb[0].mxu0
    %v495 = vadd.f32 %v274, %v494
    %v496 = vpop.f32.mrb[0].mxu0
    %497 = vmatprep.mubr.bf16.mxu0 0
    %498 = vmatmul.mubr.bf16.gmra.mrb[0].mxu0 %v346
    %v499 = vpop.f32.mrb[0].mxu0
    %v500 = vadd.f32 %v275, %v499
    %v501 = vpop.f32.mrb[0].mxu0
    %v502 = vpop.f32.mrb[0].mxu0
    %v503 = vadd.f32 %v276, %v502
    %v504 = vpop.f32.mrb[0].mxu0
    %505 = vdwg.mxu0
    %v506 = vxor.u32 %v396, 2147483648
    %v507 = vxor.u32 %v399, 2147483648
    %v508 = vxor.u32 %v404, 2147483648
    %v509 = vxor.u32 %v407, 2147483648
    %v510 = vxor.u32 %v412, 2147483648
    %v511 = vxor.u32 %v415, 2147483648
    %v512 = vxor.u32 %v420, 2147483648
    %v513 = vxor.u32 %v423, 2147483648
    %v514 = vxor.u32 %v428, 2147483648
    %v515 = vxor.u32 %v431, 2147483648
    %v516 = vxor.u32 %v436, 2147483648
    %v517 = vxor.u32 %v439, 2147483648
    %v518 = vxor.u32 %v444, 2147483648
    %v519 = vxor.u32 %v447, 2147483648
    %v520 = vxor.u32 %v452, 2147483648
    %v521 = vxor.u32 %v455, 2147483648
    %v522 = vxor.u32 %v460, 2147483648
    %v523 = vxor.u32 %v463, 2147483648
    %v524 = vxor.u32 %v468, 2147483648
    %v525 = vxor.u32 %v471, 2147483648
    %v526 = vxor.u32 %v476, 2147483648
    %v527 = vxor.u32 %v479, 2147483648
    %v528 = vxor.u32 %v484, 2147483648
    %v529 = vxor.u32 %v487, 2147483648
    %v530 = vxor.u32 %v492, 2147483648
    %v531 = vxor.u32 %v495, 2147483648
    %v532 = vxor.u32 %v500, 2147483648
    %v533 = vxor.u32 %v503, 2147483648
    %v534 = vmul.f32 %v506, 1.442695
    %v535 = vpow.pop %v534
    %v536 = vmul.f32 %v507, 1.442695
    %v537 = vpow.pop %v536
    %v538 = vmul.f32 %v508, 1.442695
    %v539 = vpow.pop %v538
    %v540 = vmul.f32 %v509, 1.442695
    %v541 = vpow.pop %v540
    %v542 = vmul.f32 %v510, 1.442695
    %v543 = vpow.pop %v542
    %v544 = vmul.f32 %v511, 1.442695
    %v545 = vpow.pop %v544
    %v546 = vmul.f32 %v512, 1.442695
    %v547 = vpow.pop %v546
    %v548 = vmul.f32 %v513, 1.442695
    %v549 = vpow.pop %v548
    %v550 = vmul.f32 %v514, 1.442695
    %v551 = vpow.pop %v550
    %v552 = vmul.f32 %v515, 1.442695
    %v553 = vpow.pop %v552
    %v554 = vmul.f32 %v516, 1.442695
    %v555 = vpow.pop %v554
    %v556 = vmul.f32 %v517, 1.442695
    %v557 = vpow.pop %v556
    %v558 = vmul.f32 %v518, 1.442695
    %v559 = vpow.pop %v558
    %v560 = vmul.f32 %v519, 1.442695
    %v561 = vpow.pop %v560
    %v562 = vmul.f32 %v520, 1.442695
    %v563 = vpow.pop %v562
    %v564 = vmul.f32 %v521, 1.442695
    %v565 = vpow.pop %v564
    %v566 = vmul.f32 %v522, 1.442695
    %v567 = vpow.pop %v566
    %v568 = vmul.f32 %v523, 1.442695
    %v569 = vpow.pop %v568
    %v570 = vmul.f32 %v524, 1.442695
    %v571 = vpow.pop %v570
    %v572 = vmul.f32 %v525, 1.442695
    %v573 = vpow.pop %v572
    %v574 = vmul.f32 %v526, 1.442695
    %v575 = vpow.pop %v574
    %v576 = vmul.f32 %v527, 1.442695
    %v577 = vpow.pop %v576
    %v578 = vmul.f32 %v528, 1.442695
    %v579 = vpow.pop %v578
    %v580 = vmul.f32 %v529, 1.442695
    %v581 = vpow.pop %v580
    %v582 = vmul.f32 %v530, 1.442695
    %v583 = vpow.pop %v582
    %v584 = vmul.f32 %v531, 1.442695
    %v585 = vpow.pop %v584
    %v586 = vmul.f32 %v532, 1.442695
    %v587 = vpow.pop %v586
    %v588 = vmul.f32 %v533, 1.442695
    %v589 = vpow.pop %v588
    %v590 = vadd.f32 %v535, 1.0
    %v591 = vadd.f32 %v537, 1.0
    %v592 = vadd.f32 %v539, 1.0
    %v593 = vadd.f32 %v541, 1.0
    %v594 = vadd.f32 %v543, 1.0
    %v595 = vadd.f32 %v545, 1.0
    %v596 = vadd.f32 %v547, 1.0
    %v597 = vadd.f32 %v549, 1.0
    %v598 = vadd.f32 %v551, 1.0
    %v599 = vadd.f32 %v553, 1.0
    %v600 = vadd.f32 %v555, 1.0
    %v601 = vadd.f32 %v557, 1.0
    %v602 = vadd.f32 %v559, 1.0
    %v603 = vadd.f32 %v561, 1.0
    %v604 = vadd.f32 %v563, 1.0
    %v605 = vadd.f32 %v565, 1.0
    %v606 = vadd.f32 %v567, 1.0
    %v607 = vadd.f32 %v569, 1.0
    %v608 = vadd.f32 %v571, 1.0
    %v609 = vadd.f32 %v573, 1.0
    %v610 = vadd.f32 %v575, 1.0
    %v611 = vadd.f32 %v577, 1.0
    %v612 = vadd.f32 %v579, 1.0
    %v613 = vadd.f32 %v581, 1.0
    %v614 = vadd.f32 %v583, 1.0
    %v615 = vadd.f32 %v585, 1.0
    %v616 = vadd.f32 %v587, 1.0
    %v617 = vadd.f32 %v589, 1.0
    %v618 = vrcp.pop %v590
    %v619 = vmul.f32 1.0, %v618
    %v620 = vrcp.pop %v591
    %v621 = vmul.f32 1.0, %v620
    %v622 = vrcp.pop %v592
    %v623 = vmul.f32 1.0, %v622
    %v624 = vrcp.pop %v593
    %v625 = vmul.f32 1.0, %v624
    %v626 = vrcp.pop %v594
    %v627 = vmul.f32 1.0, %v626
    %v628 = vrcp.pop %v595
    %v629 = vmul.f32 1.0, %v628
    %v630 = vrcp.pop %v596
    %v631 = vmul.f32 1.0, %v630
    %v632 = vrcp.pop %v597
    %v633 = vmul.f32 1.0, %v632
    %v634 = vrcp.pop %v598
    %v635 = vmul.f32 1.0, %v634
    %v636 = vrcp.pop %v599
    %v637 = vmul.f32 1.0, %v636
    %v638 = vrcp.pop %v600
    %v639 = vmul.f32 1.0, %v638
    %v640 = vrcp.pop %v601
    %v641 = vmul.f32 1.0, %v640
    %v642 = vrcp.pop %v602
    %v643 = vmul.f32 1.0, %v642
    %v644 = vrcp.pop %v603
    %v645 = vmul.f32 1.0, %v644
    %v646 = vrcp.pop %v604
    %v647 = vmul.f32 1.0, %v646
    %v648 = vrcp.pop %v605
    %v649 = vmul.f32 1.0, %v648
    %v650 = vrcp.pop %v606
    %v651 = vmul.f32 1.0, %v650
    %v652 = vrcp.pop %v607
    %v653 = vmul.f32 1.0, %v652
    %v654 = vrcp.pop %v608
    %v655 = vmul.f32 1.0, %v654
    %v656 = vrcp.pop %v609
    %v657 = vmul.f32 1.0, %v656
    %v658 = vrcp.pop %v610
    %v659 = vmul.f32 1.0, %v658
    %v660 = vrcp.pop %v611
    %v661 = vmul.f32 1.0, %v660
    %v662 = vrcp.pop %v612
    %v663 = vmul.f32 1.0, %v662
    %v664 = vrcp.pop %v613
    %v665 = vmul.f32 1.0, %v664
    %v666 = vrcp.pop %v614
    %v667 = vmul.f32 1.0, %v666
    %v668 = vrcp.pop %v615
    %v669 = vmul.f32 1.0, %v668
    %v670 = vrcp.pop %v616
    %v671 = vmul.f32 1.0, %v670
    %v672 = vrcp.pop %v617
    %v673 = vmul.f32 1.0, %v672
    %674 = vst.msk [vmem:[%s4] sm:$0xff] %vm91, %v619
    %675 = vst.msk [vmem:[%s4 + $0x8] sm:$0xff] %vm91, %v621
    %676 = vst.msk [vmem:[%s4 + $0x10] sm:$0xff] %vm91, %v623
    %677 = vst.msk [vmem:[%s4 + $0x18] sm:$0xff] %vm91, %v625
    %678 = vst.msk [vmem:[%s4 + $0x20] sm:$0xff] %vm91, %v627
    %679 = vst.msk [vmem:[%s4 + $0x28] sm:$0xff] %vm91, %v629
    %680 = vst.msk [vmem:[%s4 + $0x30] sm:$0xff] %vm91, %v631
    %681 = vst.msk [vmem:[%s4 + $0x38] sm:$0xff] %vm91, %v633
    %682 = vst.msk [vmem:[%s4 + $0x40] sm:$0xff] %vm91, %v635
    %683 = vst.msk [vmem:[%s4 + $0x48] sm:$0xff] %vm91, %v637
    %684 = vst.msk [vmem:[%s4 + $0x50] sm:$0xff] %vm91, %v639
    %685 = vst.msk [vmem:[%s4 + $0x58] sm:$0xff] %vm91, %v641
    %686 = vst.msk [vmem:[%s4 + $0x60] sm:$0xff] %vm91, %v643
    %687 = vst.msk [vmem:[%s4 + $0x68] sm:$0xff] %vm91, %v645
    %688 = vst.msk [vmem:[%s4 + $0x70] sm:$0xff] %vm91, %v647
    %689 = vst.msk [vmem:[%s4 + $0x78] sm:$0xff] %vm91, %v649
    %690 = vst.msk [vmem:[%s4 + $0x80] sm:$0xff] %vm91, %v651
    %691 = vst.msk [vmem:[%s4 + $0x88] sm:$0xff] %vm91, %v653
    %692 = vst.msk [vmem:[%s4 + $0x90] sm:$0xff] %vm91, %v655
    %693 = vst.msk [vmem:[%s4 + $0x98] sm:$0xff] %vm91, %v657
    %694 = vst.msk [vmem:[%s4 + $0xa0] sm:$0xff] %vm91, %v659
    %695 = vst.msk [vmem:[%s4 + $0xa8] sm:$0xff] %vm91, %v661
    %696 = vst.msk [vmem:[%s4 + $0xb0] sm:$0xff] %vm91, %v663
    %697 = vst.msk [vmem:[%s4 + $0xb8] sm:$0xff] %vm91, %v665
    %698 = vst.msk [vmem:[%s4 + $0xc0] sm:$0xff] %vm91, %v667
    %699 = vst.msk [vmem:[%s4 + $0xc8] sm:$0xff] %vm91, %v669
    %700 = vst.msk [vmem:[%s4 + $0xd0] sm:$0xff] %vm91, %v671
    %701 = vst.msk [vmem:[%s4 + $0xd8] sm:$0xff] %vm91, %v673
    // Predicated region
    $region30: #{forward.1} parent=1 // pred_check
      _
    $region31: #{forward.1} parent=1 // pred_check_branch
      %703 = sbr.rel (0) target = $region33
    $region32: #{forward.1} parent=1 // pred_region
      _
    $region33: #{forward.1} parent=1 // pred_fallthru
      _
    // Predicated region
    $region34: #{forward.1} parent=1 // pred_check
      _
    $region35: #{forward.1} parent=1 // pred_check_branch
      %705 = sbr.rel (0) target = $region37
    $region36: #{forward.1} parent=1 // pred_region
      _
    $region37: #{forward.1} parent=1 // pred_fallthru
      _
    %706 = vsyncpa [#allocation3], 1
    %707 = vsyncpa [#allocation5], 1

</llo_original>
